<compile_context>
chip_gen: v7x
topology: tpu7x:2x2x1
jax: 0.10.0
libtpu: 0.0.40
codegen_flags: <defaults>
</compile_context>

<pallas_src>
import jax
import jax.numpy as jnp
from jax.experimental import pallas as pl
from jax.experimental.pallas import tpu as pltpu


def _round_up(v, m):
    return ((v + m - 1) // m) * m


def _chn_mu_miso_kernel(a_ref, std_ref, x_ref, n_ref, y_ref):
    # a_ref   : SMEM (U*U,) f32   A_eff[u, u'] row-major (scalar prefetch)
    # std_ref : SMEM (U,)   f32   std_eff[u]            (scalar prefetch)
    # x_ref   : VMEM (U, tm, 128) current block of the flattened user signals
    # n_ref   : VMEM (U, tm, 128) standard-normal noise block
    # y_ref   : VMEM (U, tm, 128) decoded output block
    U = y_ref.shape[0]

    # Load each user's dense (tm, 128) slab exactly once.
    xs = [x_ref[u].astype(jnp.float32) for u in range(U)]

    for u in range(U):
        # rx_u = sum_u' A_eff[u, u'] * x[u']  : U scalar-splat FMAs on the VPU.
        acc = a_ref[u * U + 0] * xs[0]
        for up in range(1, U):
            acc = acc + a_ref[u * U + up] * xs[up]
        y = acc + std_ref[u] * n_ref[u].astype(jnp.float32)
        y_ref[u] = y.astype(y_ref.dtype)


def chn_mu_miso_forward(x, W, H, P, p_noise, key, *, step_payload_bytes=2 * 1024 * 1024):
    """x: (U, Batch, C, H, W). Returns decoded signals with the same shape/dtype as x.

    `key` is a jax.random key used for the Gaussian channel noise (the PyTorch module
    draws torch.normal on the host; here the noise realization is tile-size independent
    and fully determined by `key`).
    """
    U = x.shape[0]
    orig_shape = x.shape
    N = 1
    for d in x.shape[1:]:
        N *= d

    # Tiny (Nt x U) glue constants computed in plain JAX (free at trace time).
    f32 = jnp.float32
    sqrtP = jnp.sqrt(P.astype(f32))                        # (U,)
    G = H.astype(f32).T @ W.astype(f32)                    # (U,U): G[u,u'] = <H[:,u], W[:,u']>
    g = sqrtP * jnp.diag(G)                                # (U,)  per-user amp gain
    inv_g = 1.0 / g
    A_eff = (G * sqrtP[None, :]) * inv_g[:, None]          # (U,U) with 1/g folded in
    std_eff = jnp.sqrt(p_noise.astype(f32) / 2.0) * inv_g  # (U,)
    a_flat = A_eff.reshape(U * U)

    # Sublane-dense layout: (U, M, 128) with the lane axis exactly 128 wide.
    N_pad = _round_up(N, 128)
    x_flat = x.reshape(U, N)
    if N_pad != N:
        x_flat = jnp.pad(x_flat, ((0, 0), (0, N_pad - N)))
    M = N_pad // 128
    x3 = x_flat.reshape(U, M, 128)

    # Standard-normal noise, scaled per-user inside the kernel.
    noise = jax.random.normal(key, (U, M, 128), dtype=f32)

    # Block sizing: target ~step_payload_bytes of (x + noise + y) traffic per grid step.
    bytes_per_row = 3 * U * 128 * 4
    tm_target = max(8, _round_up(step_payload_bytes // bytes_per_row, 8))
    tm_eff = M if tm_target >= M else tm_target            # full dim or a multiple of 8
    n_blocks = pl.cdiv(M, tm_eff)

    cost = pl.CostEstimate(
        flops=2 * U * U * N_pad + 2 * U * N_pad,
        transcendentals=0,
        bytes_accessed=3 * U * N_pad * 4,
    )

    # TODO(synk): if the caller never reuses x, input_output_aliases={2: 0} would
    # recycle x's HBM allocation for the output (shape/dtype match).
    out = pl.pallas_call(
        _chn_mu_miso_kernel,
        out_shape=jax.ShapeDtypeStruct((U, M, 128), x.dtype),
        grid_spec=pltpu.PrefetchScalarGridSpec(
            num_scalar_prefetch=2,
            grid=(n_blocks,),
            in_specs=[
                pl.BlockSpec((U, tm_eff, 128), lambda i, a, s: (0, i, 0)),
                pl.BlockSpec((U, tm_eff, 128), lambda i, a, s: (0, i, 0)),
            ],
            out_specs=pl.BlockSpec((U, tm_eff, 128), lambda i, a, s: (0, i, 0)),
        ),
        compiler_params=pltpu.CompilerParams(
            dimension_semantics=("parallel",)),
        cost_estimate=cost,
    )(a_flat, std_eff, x3, noise)

    y = out.reshape(U, N_pad)
    if N_pad != N:
        y = y[:, :N]
    return y.reshape(orig_shape)


def _reference_noiseless(x, W, H, P):
    """Pure-JAX transcription of the PyTorch loops, with the noise term removed."""
    U = x.shape[0]
    Nt = W.shape[0]
    bshape = (Nt,) + (1,) * (x.ndim - 1)
    combined = jnp.zeros((Nt,) + x.shape[1:], jnp.float32)
    for u in range(U):
        combined = combined + jnp.sqrt(P[u]) * x[u][None] * W[:, u].reshape(bshape)
    ys = []
    for u in range(U):
        rec = jnp.sum(combined * H[:, u].reshape(bshape), axis=0)
        amp = jnp.sqrt(P[u]) * jnp.dot(H[:, u], W[:, u])
        ys.append(rec / amp)
    return jnp.stack(ys)


if __name__ == "__main__":
    key = jax.random.PRNGKey(0)
    k_w, k_h, k_p, k_n, k_x, k_noise = jax.random.split(key, 6)

    U, Nt = 4, 8
    B, C, Hh, Ww = 2, 4, 16, 16

    # Deterministic synthetic parameters (W columns unit-normalized, matching the module).
    W_raw = jax.random.normal(k_w, (Nt, U), dtype=jnp.float32)
    W_mat = W_raw / jnp.linalg.norm(W_raw, axis=0, keepdims=True)
    H_mat = jax.random.normal(k_h, (Nt, U), dtype=jnp.float32)
    P_vec = jax.random.uniform(k_p, (U,), dtype=jnp.float32, minval=0.5, maxval=2.0)
    p_noise = jax.random.uniform(k_n, (U,), dtype=jnp.float32, minval=0.01, maxval=0.1)

    x = jax.random.normal(k_x, (U, B, C, Hh, Ww), dtype=jnp.float32)

    fwd = jax.jit(chn_mu_miso_forward, static_argnames=("step_payload_bytes",))

    # 1) Deterministic math check: zero noise power => exact (noiseless) channel output.
    y0 = jax.block_until_ready(fwd(x, W_mat, H_mat, P_vec, jnp.zeros_like(p_noise), k_noise))
    y_ref = _reference_noiseless(x, W_mat, H_mat, P_vec)
    assert y0.shape == x.shape and y0.dtype == x.dtype
    assert jnp.allclose(y0, y_ref, rtol=1e-4, atol=1e-4)

    # 2) Noise path: determinism for a fixed key + statistics of the Gaussian noise.
    y1 = jax.block_until_ready(fwd(x, W_mat, H_mat, P_vec, p_noise, k_noise))
    y1b = jax.block_until_ready(fwd(x, W_mat, H_mat, P_vec, p_noise, k_noise))
    assert jnp.array_equal(y1, y1b)  # same key -> identical noise realization

    resid = (y1 - y_ref).reshape(U, -1)
    g = jnp.sqrt(P_vec) * jnp.sum(H_mat * W_mat, axis=0)
    expected_std = jnp.sqrt(p_noise / 2.0) / jnp.abs(g)
    meas_std = jnp.std(resid, axis=1)
    meas_mean = jnp.mean(resid, axis=1)
    assert jnp.all(jnp.abs(meas_std - expected_std) < 0.15 * expected_std)
    assert jnp.all(jnp.abs(meas_mean) < 0.2 * expected_std)

    print("KERNEL_OK")
</pallas_src>

<mosaic_0001>
module attributes {stable_mosaic.version = 11 : i64} {
  func.func @_chn_mu_miso_kernel(%arg0: i32, %arg1: memref<16xf32, #tpu.memory_space<smem>>, %arg2: memref<4xf32, #tpu.memory_space<smem>>, %arg3: memref<4x16x128xf32, #tpu.memory_space<vmem>>, %arg4: memref<4x16x128xf32, #tpu.memory_space<vmem>>, %arg5: memref<4x16x128xf32, #tpu.memory_space<vmem>>) attributes {dimension_semantics = [#tpu.dimension_semantics<parallel>], iteration_bounds = array<i64: 1>, scalar_prefetch = 2 : i64, scratch_operands = 0 : i64, tpu.core_type = #tpu.core_type<tc>, window_params = [{transform_indices = @transform_0, window_bounds = array<i64: 4, 16, 128>}, {transform_indices = @transform_1, window_bounds = array<i64: 4, 16, 128>}, {transform_indices = @transform_2, window_bounds = array<i64: 4, 16, 128>}]} {
    %c0 = arith.constant 0 : index
    %c0_0 = arith.constant 0 : index
    %c0_1 = arith.constant 0 : index
    %0 = vector.load %arg3[%c0, %c0_0, %c0_1] : memref<4x16x128xf32, #tpu.memory_space<vmem>>, vector<1x16x128xf32>
    %1 = vector.shape_cast %0 : vector<1x16x128xf32> to vector<16x128xf32>
    %c1 = arith.constant 1 : index
    %c0_2 = arith.constant 0 : index
    %c0_3 = arith.constant 0 : index
    %2 = vector.load %arg3[%c1, %c0_2, %c0_3] : memref<4x16x128xf32, #tpu.memory_space<vmem>>, vector<1x16x128xf32>
    %3 = vector.shape_cast %2 : vector<1x16x128xf32> to vector<16x128xf32>
    %c2 = arith.constant 2 : index
    %c0_4 = arith.constant 0 : index
    %c0_5 = arith.constant 0 : index
    %4 = vector.load %arg3[%c2, %c0_4, %c0_5] : memref<4x16x128xf32, #tpu.memory_space<vmem>>, vector<1x16x128xf32>
    %5 = vector.shape_cast %4 : vector<1x16x128xf32> to vector<16x128xf32>
    %c3 = arith.constant 3 : index
    %c0_6 = arith.constant 0 : index
    %c0_7 = arith.constant 0 : index
    %6 = vector.load %arg3[%c3, %c0_6, %c0_7] : memref<4x16x128xf32, #tpu.memory_space<vmem>>, vector<1x16x128xf32>
    %7 = vector.shape_cast %6 : vector<1x16x128xf32> to vector<16x128xf32>
    %c0_8 = arith.constant 0 : index
    %8 = memref.load %arg1[%c0_8] : memref<16xf32, #tpu.memory_space<smem>>
    %9 = vector.broadcast %8 : f32 to vector<16x128xf32>
    %10 = arith.mulf %9, %1 : vector<16x128xf32>
    %c1_9 = arith.constant 1 : index
    %11 = memref.load %arg1[%c1_9] : memref<16xf32, #tpu.memory_space<smem>>
    %12 = vector.broadcast %11 : f32 to vector<16x128xf32>
    %13 = arith.mulf %12, %3 : vector<16x128xf32>
    %14 = arith.addf %10, %13 : vector<16x128xf32>
    %c2_10 = arith.constant 2 : index
    %15 = memref.load %arg1[%c2_10] : memref<16xf32, #tpu.memory_space<smem>>
    %16 = vector.broadcast %15 : f32 to vector<16x128xf32>
    %17 = arith.mulf %16, %5 : vector<16x128xf32>
    %18 = arith.addf %14, %17 : vector<16x128xf32>
    %c3_11 = arith.constant 3 : index
    %19 = memref.load %arg1[%c3_11] : memref<16xf32, #tpu.memory_space<smem>>
    %20 = vector.broadcast %19 : f32 to vector<16x128xf32>
    %21 = arith.mulf %20, %7 : vector<16x128xf32>
    %22 = arith.addf %18, %21 : vector<16x128xf32>
    %c0_12 = arith.constant 0 : index
    %23 = memref.load %arg2[%c0_12] : memref<4xf32, #tpu.memory_space<smem>>
    %c0_13 = arith.constant 0 : index
    %c0_14 = arith.constant 0 : index
    %c0_15 = arith.constant 0 : index
    %24 = vector.load %arg4[%c0_13, %c0_14, %c0_15] : memref<4x16x128xf32, #tpu.memory_space<vmem>>, vector<1x16x128xf32>
    %25 = vector.shape_cast %24 : vector<1x16x128xf32> to vector<16x128xf32>
    %26 = vector.broadcast %23 : f32 to vector<16x128xf32>
    %27 = arith.mulf %26, %25 : vector<16x128xf32>
    %28 = arith.addf %22, %27 : vector<16x128xf32>
    %c0_16 = arith.constant 0 : index
    %c0_17 = arith.constant 0 : index
    %c0_18 = arith.constant 0 : index
    %29 = vector.load %arg5[%c0_16, %c0_17, %c0_18] : memref<4x16x128xf32, #tpu.memory_space<vmem>>, vector<1x16x128xf32>
    %30 = vector.shape_cast %29 : vector<1x16x128xf32> to vector<16x128xf32>
    %31 = vector.shape_cast %28 : vector<16x128xf32> to vector<1x16x128xf32>
    tpu.vector_store %arg5[%c0_16, %c0_17, %c0_18], %31 {strides = array<i32>} : memref<4x16x128xf32, #tpu.memory_space<vmem>>, vector<1x16x128xf32>,
    %c4 = arith.constant 4 : index
    %32 = memref.load %arg1[%c4] : memref<16xf32, #tpu.memory_space<smem>>
    %33 = vector.broadcast %32 : f32 to vector<16x128xf32>
    %34 = arith.mulf %33, %1 : vector<16x128xf32>
    %c5 = arith.constant 5 : index
    %35 = memref.load %arg1[%c5] : memref<16xf32, #tpu.memory_space<smem>>
    %36 = vector.broadcast %35 : f32 to vector<16x128xf32>
    %37 = arith.mulf %36, %3 : vector<16x128xf32>
    %38 = arith.addf %34, %37 : vector<16x128xf32>
    %c6 = arith.constant 6 : index
    %39 = memref.load %arg1[%c6] : memref<16xf32, #tpu.memory_space<smem>>
    %40 = vector.broadcast %39 : f32 to vector<16x128xf32>
    %41 = arith.mulf %40, %5 : vector<16x128xf32>
    %42 = arith.addf %38, %41 : vector<16x128xf32>
    %c7 = arith.constant 7 : index
    %43 = memref.load %arg1[%c7] : memref<16xf32, #tpu.memory_space<smem>>
    %44 = vector.broadcast %43 : f32 to vector<16x128xf32>
    %45 = arith.mulf %44, %7 : vector<16x128xf32>
    %46 = arith.addf %42, %45 : vector<16x128xf32>
    %c1_19 = arith.constant 1 : index
    %47 = memref.load %arg2[%c1_19] : memref<4xf32, #tpu.memory_space<smem>>
    %c1_20 = arith.constant 1 : index
    %c0_21 = arith.constant 0 : index
    %c0_22 = arith.constant 0 : index
    %48 = vector.load %arg4[%c1_20, %c0_21, %c0_22] : memref<4x16x128xf32, #tpu.memory_space<vmem>>, vector<1x16x128xf32>
    %49 = vector.shape_cast %48 : vector<1x16x128xf32> to vector<16x128xf32>
    %50 = vector.broadcast %47 : f32 to vector<16x128xf32>
    %51 = arith.mulf %50, %49 : vector<16x128xf32>
    %52 = arith.addf %46, %51 : vector<16x128xf32>
    %c1_23 = arith.constant 1 : index
    %c0_24 = arith.constant 0 : index
    %c0_25 = arith.constant 0 : index
    %53 = vector.load %arg5[%c1_23, %c0_24, %c0_25] : memref<4x16x128xf32, #tpu.memory_space<vmem>>, vector<1x16x128xf32>
    %54 = vector.shape_cast %53 : vector<1x16x128xf32> to vector<16x128xf32>
    %55 = vector.shape_cast %52 : vector<16x128xf32> to vector<1x16x128xf32>
    tpu.vector_store %arg5[%c1_23, %c0_24, %c0_25], %55 {strides = array<i32>} : memref<4x16x128xf32, #tpu.memory_space<vmem>>, vector<1x16x128xf32>,
    %c8 = arith.constant 8 : index
    %56 = memref.load %arg1[%c8] : memref<16xf32, #tpu.memory_space<smem>>
    %57 = vector.broadcast %56 : f32 to vector<16x128xf32>
    %58 = arith.mulf %57, %1 : vector<16x128xf32>
    %c9 = arith.constant 9 : index
    %59 = memref.load %arg1[%c9] : memref<16xf32, #tpu.memory_space<smem>>
    %60 = vector.broadcast %59 : f32 to vector<16x128xf32>
    %61 = arith.mulf %60, %3 : vector<16x128xf32>
    %62 = arith.addf %58, %61 : vector<16x128xf32>
    %c10 = arith.constant 10 : index
    %63 = memref.load %arg1[%c10] : memref<16xf32, #tpu.memory_space<smem>>
    %64 = vector.broadcast %63 : f32 to vector<16x128xf32>
    %65 = arith.mulf %64, %5 : vector<16x128xf32>
    %66 = arith.addf %62, %65 : vector<16x128xf32>
    %c11 = arith.constant 11 : index
    %67 = memref.load %arg1[%c11] : memref<16xf32, #tpu.memory_space<smem>>
    %68 = vector.broadcast %67 : f32 to vector<16x128xf32>
    %69 = arith.mulf %68, %7 : vector<16x128xf32>
    %70 = arith.addf %66, %69 : vector<16x128xf32>
    %c2_26 = arith.constant 2 : index
    %71 = memref.load %arg2[%c2_26] : memref<4xf32, #tpu.memory_space<smem>>
    %c2_27 = arith.constant 2 : index
    %c0_28 = arith.constant 0 : index
    %c0_29 = arith.constant 0 : index
    %72 = vector.load %arg4[%c2_27, %c0_28, %c0_29] : memref<4x16x128xf32, #tpu.memory_space<vmem>>, vector<1x16x128xf32>
    %73 = vector.shape_cast %72 : vector<1x16x128xf32> to vector<16x128xf32>
    %74 = vector.broadcast %71 : f32 to vector<16x128xf32>
    %75 = arith.mulf %74, %73 : vector<16x128xf32>
    %76 = arith.addf %70, %75 : vector<16x128xf32>
    %c2_30 = arith.constant 2 : index
    %c0_31 = arith.constant 0 : index
    %c0_32 = arith.constant 0 : index
    %77 = vector.load %arg5[%c2_30, %c0_31, %c0_32] : memref<4x16x128xf32, #tpu.memory_space<vmem>>, vector<1x16x128xf32>
    %78 = vector.shape_cast %77 : vector<1x16x128xf32> to vector<16x128xf32>
    %79 = vector.shape_cast %76 : vector<16x128xf32> to vector<1x16x128xf32>
    tpu.vector_store %arg5[%c2_30, %c0_31, %c0_32], %79 {strides = array<i32>} : memref<4x16x128xf32, #tpu.memory_space<vmem>>, vector<1x16x128xf32>,
    %c12 = arith.constant 12 : index
    %80 = memref.load %arg1[%c12] : memref<16xf32, #tpu.memory_space<smem>>
    %81 = vector.broadcast %80 : f32 to vector<16x128xf32>
    %82 = arith.mulf %81, %1 : vector<16x128xf32>
    %c13 = arith.constant 13 : index
    %83 = memref.load %arg1[%c13] : memref<16xf32, #tpu.memory_space<smem>>
    %84 = vector.broadcast %83 : f32 to vector<16x128xf32>
    %85 = arith.mulf %84, %3 : vector<16x128xf32>
    %86 = arith.addf %82, %85 : vector<16x128xf32>
    %c14 = arith.constant 14 : index
    %87 = memref.load %arg1[%c14] : memref<16xf32, #tpu.memory_space<smem>>
    %88 = vector.broadcast %87 : f32 to vector<16x128xf32>
    %89 = arith.mulf %88, %5 : vector<16x128xf32>
    %90 = arith.addf %86, %89 : vector<16x128xf32>
    %c15 = arith.constant 15 : index
    %91 = memref.load %arg1[%c15] : memref<16xf32, #tpu.memory_space<smem>>
    %92 = vector.broadcast %91 : f32 to vector<16x128xf32>
    %93 = arith.mulf %92, %7 : vector<16x128xf32>
    %94 = arith.addf %90, %93 : vector<16x128xf32>
    %c3_33 = arith.constant 3 : index
    %95 = memref.load %arg2[%c3_33] : memref<4xf32, #tpu.memory_space<smem>>
    %c3_34 = arith.constant 3 : index
    %c0_35 = arith.constant 0 : index
    %c0_36 = arith.constant 0 : index
    %96 = vector.load %arg4[%c3_34, %c0_35, %c0_36] : memref<4x16x128xf32, #tpu.memory_space<vmem>>, vector<1x16x128xf32>
    %97 = vector.shape_cast %96 : vector<1x16x128xf32> to vector<16x128xf32>
    %98 = vector.broadcast %95 : f32 to vector<16x128xf32>
    %99 = arith.mulf %98, %97 : vector<16x128xf32>
    %100 = arith.addf %94, %99 : vector<16x128xf32>
    %c3_37 = arith.constant 3 : index
    %c0_38 = arith.constant 0 : index
    %c0_39 = arith.constant 0 : index
    %101 = vector.load %arg5[%c3_37, %c0_38, %c0_39] : memref<4x16x128xf32, #tpu.memory_space<vmem>>, vector<1x16x128xf32>
    %102 = vector.shape_cast %101 : vector<1x16x128xf32> to vector<16x128xf32>
    %103 = vector.shape_cast %100 : vector<16x128xf32> to vector<1x16x128xf32>
    tpu.vector_store %arg5[%c3_37, %c0_38, %c0_39], %103 {strides = array<i32>} : memref<4x16x128xf32, #tpu.memory_space<vmem>>, vector<1x16x128xf32>,
    return
  }
  func.func @transform_0(%arg0: i32, %arg1: memref<16xf32, #tpu.memory_space<smem>>, %arg2: memref<4xf32, #tpu.memory_space<smem>>) -> (i32, i32, i32) {
    %c0_i32 = arith.constant 0 : i32
    %c0_i32_0 = arith.constant 0 : i32
    %c0_i32_1 = arith.constant 0 : i32
    return %c0_i32, %arg0, %c0_i32_0 : i32, i32, i32
  }
  func.func @transform_1(%arg0: i32, %arg1: memref<16xf32, #tpu.memory_space<smem>>, %arg2: memref<4xf32, #tpu.memory_space<smem>>) -> (i32, i32, i32) {
    %c0_i32 = arith.constant 0 : i32
    %c0_i32_0 = arith.constant 0 : i32
    %c0_i32_1 = arith.constant 0 : i32
    return %c0_i32, %arg0, %c0_i32_0 : i32, i32, i32
  }
  func.func @transform_2(%arg0: i32, %arg1: memref<16xf32, #tpu.memory_space<smem>>, %arg2: memref<4xf32, #tpu.memory_space<smem>>) -> (i32, i32, i32) {
    %c0_i32 = arith.constant 0 : i32
    %c0_i32_0 = arith.constant 0 : i32
    %c0_i32_1 = arith.constant 0 : i32
    return %c0_i32, %arg0, %c0_i32_0 : i32, i32, i32
  }
}

</mosaic_0001>

<llo_original>
// kernel: chn_mu_miso_forward.1
$region0: #{chn_mu_miso_forward.1}
  #allocation0 [shape = 'u32[]', space=smem, size = 0x4, offset = 0x4, fixed_abs, tag = 'smem constant byte address 0x4 - core index']
  #allocation1 [shape = 'u32[144,128]{1,0:T(1,128)}', space=vmem, size = 0x12000, scoped, tag = 'internal scratch']
  #allocation2 [shape = 's32[1]{0}', space=sflag, size = 0x4, scoped, tag = 'scoped memory for chn_mu_miso_forward.1']
  #allocation3 [shape = 'u8[512]{0}', space=smem, size = 0x200, scoped, tag = 'prefetched SMEM operand 0']
  #allocation4 [shape = 'u8[512]{0}', space=smem, size = 0x200, scoped, tag = 'prefetched SMEM operand 1']
  %s0 = inlined_call_operand.vmem [shape: f32[16], index: 0, kind: input, shape index: {}]
  %s1 = inlined_call_operand.vmem [shape: f32[4], index: 1, kind: input, shape index: {}]
  %s2 = inlined_call_operand.vmem [shape: f32[4,16,128], index: 2, kind: input, shape index: {}]
  %s3 = inlined_call_operand.vmem [shape: f32[4,16,128], index: 3, kind: input, shape index: {}]
  %s4 = inlined_call_operand.vmem [shape: f32[4,16,128], index: 4, kind: output, shape index: {}]
  %s5 = sld [smem:[#allocation0]]
  $region18: #{chn_mu_miso_forward.1} parent=0
    _
  %s7 = ssub.s32 1, %s5
  %s8 = scalar_select 0, %s7, %s5
  %s9 = sshll.u32 %s0, 4
  %s10 = int_to_ptr.vmem [resolvable:$true] %s9
  %12 = dma.vmem_to_smem %s10, 16, [#allocation3], [#allocation2]
  %s13 = sshll.u32 %s1, 4
  %s14 = int_to_ptr.vmem [resolvable:$true] %s13
  %16 = dma.vmem_to_smem %s14, 16, [#allocation4], [#allocation2]
  %17 = dma.done [#allocation2], 32
  %18 = sfence
  // Predicated region
  $region2: #{chn_mu_miso_forward.1} parent=0 // pred_check
    _
  $region3: #{chn_mu_miso_forward.1} parent=0 // pred_check_branch
    %20 = sbr.rel (0) target = $region5
  $region4: #{chn_mu_miso_forward.1} parent=0 // pred_region
    _
  $region5: #{chn_mu_miso_forward.1} parent=0 // pred_fallthru
    _
  // Predicated region
  $region6: #{chn_mu_miso_forward.1} parent=0 // pred_check
    _
  $region7: #{chn_mu_miso_forward.1} parent=0 // pred_check_branch
    %22 = sbr.rel (0) target = $region9
  $region8: #{chn_mu_miso_forward.1} parent=0 // pred_region
    _
  $region9: #{chn_mu_miso_forward.1} parent=0 // pred_fallthru
    _
  %v23 = vld [vmem:[%s2] sm:$0xff]
  %v24 = vld [vmem:[%s2 + $0x8] sm:$0xff]
  %s25 = scalar_lea.vmem %s2, 16
  %v26 = vld [vmem:[%s25] sm:$0xff]
  %v27 = vld [vmem:[%s25 + $0x8] sm:$0xff]
  %s28 = scalar_lea.vmem %s2, 32
  %v29 = vld [vmem:[%s28] sm:$0xff]
  %v30 = vld [vmem:[%s28 + $0x8] sm:$0xff]
  %s31 = scalar_lea.vmem %s2, 48
  %v32 = vld [vmem:[%s31] sm:$0xff]
  %v33 = vld [vmem:[%s31 + $0x8] sm:$0xff]
  %s34 = sld [smem:[#allocation3]]
  %v35 = vstv %s34
  %v36 = vmul.f32 %v35, %v23
  %v37 = vmul.f32 %v35, %v24
  %s38 = sld [smem:[#allocation3 + $0x1]]
  %v39 = vstv %s38
  %v40 = vmul.f32 %v39, %v26
  %v41 = vmul.f32 %v39, %v27
  %v42 = vadd.f32 %v36, %v40
  %v43 = vadd.f32 %v37, %v41
  %s44 = sld [smem:[#allocation3 + $0x2]]
  %v45 = vstv %s44
  %v46 = vmul.f32 %v45, %v29
  %v47 = vmul.f32 %v45, %v30
  %v48 = vadd.f32 %v42, %v46
  %v49 = vadd.f32 %v43, %v47
  %s50 = sld [smem:[#allocation3 + $0x3]]
  %v51 = vstv %s50
  %v52 = vmul.f32 %v51, %v32
  %v53 = vmul.f32 %v51, %v33
  %v54 = vadd.f32 %v48, %v52
  %v55 = vadd.f32 %v49, %v53
  %s56 = sld [smem:[#allocation4]]
  %v57 = vld [vmem:[%s3] sm:$0xff]
  %v58 = vld [vmem:[%s3 + $0x8] sm:$0xff]
  %v59 = vstv %s56
  %v60 = vmul.f32 %v59, %v57
  %v61 = vmul.f32 %v59, %v58
  %v62 = vadd.f32 %v54, %v60
  %v63 = vadd.f32 %v55, %v61
  %64 = vst [vmem:[%s4] sm:$0xff] %v62
  %65 = vst [vmem:[%s4 + $0x8] sm:$0xff] %v63
  %s66 = sld [smem:[#allocation3 + $0x4]]
  %v67 = vstv %s66
  %v68 = vmul.f32 %v67, %v23
  %v69 = vmul.f32 %v67, %v24
  %s70 = sld [smem:[#allocation3 + $0x5]]
  %v71 = vstv %s70
  %v72 = vmul.f32 %v71, %v26
  %v73 = vmul.f32 %v71, %v27
  %v74 = vadd.f32 %v68, %v72
  %v75 = vadd.f32 %v69, %v73
  %s76 = sld [smem:[#allocation3 + $0x6]]
  %v77 = vstv %s76
  %v78 = vmul.f32 %v77, %v29
  %v79 = vmul.f32 %v77, %v30
  %v80 = vadd.f32 %v74, %v78
  %v81 = vadd.f32 %v75, %v79
  %s82 = sld [smem:[#allocation3 + $0x7]]
  %v83 = vstv %s82
  %v84 = vmul.f32 %v83, %v32
  %v85 = vmul.f32 %v83, %v33
  %v86 = vadd.f32 %v80, %v84
  %v87 = vadd.f32 %v81, %v85
  %s88 = sld [smem:[#allocation4 + $0x1]]
  %s89 = scalar_lea.vmem %s3, 16
  %v90 = vld [vmem:[%s89] sm:$0xff]
  %v91 = vld [vmem:[%s89 + $0x8] sm:$0xff]
  %v92 = vstv %s88
  %v93 = vmul.f32 %v92, %v90
  %v94 = vmul.f32 %v92, %v91
  %v95 = vadd.f32 %v86, %v93
  %v96 = vadd.f32 %v87, %v94
  %s97 = scalar_lea.vmem %s4, 16
  %98 = vst [vmem:[%s97] sm:$0xff] %v95
  %99 = vst [vmem:[%s97 + $0x8] sm:$0xff] %v96
  %s100 = sld [smem:[#allocation3 + $0x8]]
  %v101 = vstv %s100
  %v102 = vmul.f32 %v101, %v23
  %v103 = vmul.f32 %v101, %v24
  %s104 = sld [smem:[#allocation3 + $0x9]]
  %v105 = vstv %s104
  %v106 = vmul.f32 %v105, %v26
  %v107 = vmul.f32 %v105, %v27
  %v108 = vadd.f32 %v102, %v106
  %v109 = vadd.f32 %v103, %v107
  %s110 = sld [smem:[#allocation3 + $0xa]]
  %v111 = vstv %s110
  %v112 = vmul.f32 %v111, %v29
  %v113 = vmul.f32 %v111, %v30
  %v114 = vadd.f32 %v108, %v112
  %v115 = vadd.f32 %v109, %v113
  %s116 = sld [smem:[#allocation3 + $0xb]]
  %v117 = vstv %s116
  %v118 = vmul.f32 %v117, %v32
  %v119 = vmul.f32 %v117, %v33
  %v120 = vadd.f32 %v114, %v118
  %v121 = vadd.f32 %v115, %v119
  %s122 = sld [smem:[#allocation4 + $0x2]]
  %s123 = scalar_lea.vmem %s3, 32
  %v124 = vld [vmem:[%s123] sm:$0xff]
  %v125 = vld [vmem:[%s123 + $0x8] sm:$0xff]
  %v126 = vstv %s122
  %v127 = vmul.f32 %v126, %v124
  %v128 = vmul.f32 %v126, %v125
  %v129 = vadd.f32 %v120, %v127
  %v130 = vadd.f32 %v121, %v128
  %s131 = scalar_lea.vmem %s4, 32
  %132 = vst [vmem:[%s131] sm:$0xff] %v129
  %133 = vst [vmem:[%s131 + $0x8] sm:$0xff] %v130
  %s134 = sld [smem:[#allocation3 + $0xc]]
  %v135 = vstv %s134
  %v136 = vmul.f32 %v135, %v23
  %v137 = vmul.f32 %v135, %v24
  %s138 = sld [smem:[#allocation3 + $0xd]]
  %v139 = vstv %s138
  %v140 = vmul.f32 %v139, %v26
  %v141 = vmul.f32 %v139, %v27
  %v142 = vadd.f32 %v136, %v140
  %v143 = vadd.f32 %v137, %v141
  %s144 = sld [smem:[#allocation3 + $0xe]]
  %v145 = vstv %s144
  %v146 = vmul.f32 %v145, %v29
  %v147 = vmul.f32 %v145, %v30
  %v148 = vadd.f32 %v142, %v146
  %v149 = vadd.f32 %v143, %v147
  %s150 = sld [smem:[#allocation3 + $0xf]]
  %v151 = vstv %s150
  %v152 = vmul.f32 %v151, %v32
  %v153 = vmul.f32 %v151, %v33
  %v154 = vadd.f32 %v148, %v152
  %v155 = vadd.f32 %v149, %v153
  %s156 = sld [smem:[#allocation4 + $0x3]]
  %s157 = scalar_lea.vmem %s3, 48
  %v158 = vld [vmem:[%s157] sm:$0xff]
  %v159 = vld [vmem:[%s157 + $0x8] sm:$0xff]
  %v160 = vstv %s156
  %v161 = vmul.f32 %v160, %v158
  %v162 = vmul.f32 %v160, %v159
  %v163 = vadd.f32 %v154, %v161
  %v164 = vadd.f32 %v155, %v162
  %s165 = scalar_lea.vmem %s4, 48
  %166 = vst [vmem:[%s165] sm:$0xff] %v163
  %167 = vst [vmem:[%s165 + $0x8] sm:$0xff] %v164
  // Predicated region
  $region10: #{chn_mu_miso_forward.1} parent=0 // pred_check
    _
  $region11: #{chn_mu_miso_forward.1} parent=0 // pred_check_branch
    %169 = sbr.rel (0) target = $region13
  $region12: #{chn_mu_miso_forward.1} parent=0 // pred_region
    _
  $region13: #{chn_mu_miso_forward.1} parent=0 // pred_fallthru
    _
  // Predicated region
  $region14: #{chn_mu_miso_forward.1} parent=0 // pred_check
    _
  $region15: #{chn_mu_miso_forward.1} parent=0 // pred_check_branch
    %171 = sbr.rel (0) target = $region17
  $region16: #{chn_mu_miso_forward.1} parent=0 // pred_region
    _
  $region17: #{chn_mu_miso_forward.1} parent=0 // pred_fallthru
    _

</llo_original>
